<compile_context>
chip_gen: v7x
topology: tpu7x:2x2x1
jax: 0.10.0
libtpu: 0.0.40
codegen_flags: <defaults>
</compile_context>

<pallas_src>
import functools
import math

import jax
import jax.numpy as jnp
from jax.experimental import pallas as pl
from jax.experimental.pallas import tpu as pltpu

_LANES = 128
_SUBLANES = 8


def _round_up(x, m):
    return ((x + m - 1) // m) * m


def _pick_tile_n(n):
    """Big tile to amortize per-step overhead, but keep >= 2 grid steps."""
    max_tile = 1024
    half = _round_up(pl.cdiv(n, 2), _SUBLANES)
    return max(_SUBLANES, min(max_tile, half))


def _rbf_ffn_kernel(x_ref, cst_ref, csq_ref, inv_ls_ref, wt_ref, b_ref, o_ref,
                    *, lane_dense):
    # x_ref:      (TN, D)   tile of flattened inputs
    # cst_ref:    (D, Dk)   pre-scaled centers, transposed:  (centers / ls).T
    # csq_ref:    (1, Dk)   precomputed ||centers / ls||^2
    # inv_ls_ref: (1, D)    1 / lengthscale (ARD, per input dim)
    # wt_ref:     (Dk, D)   linear_out weight transposed (natural MXU layout)
    # b_ref:      (1, D)    linear_out bias
    # o_ref:      (TN, D)   or lane-dense (TN*D/128, 128)
    xs = x_ref[...] * inv_ls_ref[...]                              # (TN, D)
    x_sq = jnp.sum(xs * xs, axis=-1, keepdims=True)                # (TN, 1)
    cross = jnp.dot(xs, cst_ref[...],
                    preferred_element_type=jnp.float32)            # (TN, Dk)
    sq_dist = jnp.maximum(x_sq - 2.0 * cross + csq_ref[...], 0.0)  # gpytorch clamp
    k_feat = jnp.exp(-0.5 * sq_dist)                               # (TN, Dk)
    out = jnp.dot(k_feat, wt_ref[...],
                  preferred_element_type=jnp.float32) + b_ref[...]
    if lane_dense:
        rows, lanes = o_ref.shape
        out = out.reshape(rows, lanes)      # row-major (TN, D) -> (TN*D/128, 128)
    o_ref[...] = out.astype(o_ref.dtype)


@functools.partial(jax.jit, static_argnames=("tile_n", "lane_dense"))
def _launch(x_pad, cs_t, c_sq, inv_ls, w_t, b2, *, tile_n, lane_dense):
    n_pad, d = x_pad.shape
    dk = cs_t.shape[1]
    grid = (n_pad // tile_n,)

    if lane_dense:
        tile_rows = (tile_n * d) // _LANES
        out_rows = (n_pad * d) // _LANES
        out_shape = jax.ShapeDtypeStruct((out_rows, _LANES), x_pad.dtype)
        out_spec = pl.BlockSpec((tile_rows, _LANES), lambda i: (i, 0))
    else:
        out_shape = jax.ShapeDtypeStruct((n_pad, d), x_pad.dtype)
        out_spec = pl.BlockSpec((tile_n, d), lambda i: (i, 0))

    # Explicit scoped-VMEM budget: double-buffered in/out tiles + constants +
    # slack. Stays well under v7x's 64 MiB physical VMEM.
    tile_bytes = tile_n * d * 4
    const_bytes = (2 * d * dk + dk + 3 * d) * 4
    vmem_limit = 2 * 2 * tile_bytes + 2 * const_bytes + (8 << 20)
    vmem_limit = int(min(max(vmem_limit, 16 << 20), 40 << 20))

    kernel = functools.partial(_rbf_ffn_kernel, lane_dense=lane_dense)
    return pl.pallas_call(
        kernel,
        out_shape=out_shape,
        grid_spec=pltpu.PrefetchScalarGridSpec(
            num_scalar_prefetch=0,
            grid=grid,
            in_specs=[
                pl.BlockSpec((tile_n, d), lambda i: (i, 0)),  # x tile
                pl.BlockSpec((d, dk), lambda i: (0, 0)),      # (centers/ls).T
                pl.BlockSpec((1, dk), lambda i: (0, 0)),      # ||centers/ls||^2
                pl.BlockSpec((1, d), lambda i: (0, 0)),       # 1 / lengthscale
                pl.BlockSpec((dk, d), lambda i: (0, 0)),      # W_out.T
                pl.BlockSpec((1, d), lambda i: (0, 0)),       # bias
            ],
            out_specs=out_spec,
        ),
        compiler_params=pltpu.CompilerParams(
            dimension_semantics=("parallel",),
            vmem_limit_bytes=vmem_limit),
    )(x_pad, cs_t, c_sq, inv_ls, w_t, b2)


def rbf_kernel_ffn(x, centers, lengthscale, w_out, b_out, *, tile_n=None):
    B, L, D = x.shape
    Dk = centers.shape[0]
    N = B * L
    x_flat = x.reshape(N, D).astype(jnp.float32)

    # Grid-invariant prep hoisted out of the kernel (done once per call).
    inv_ls = (1.0 / lengthscale).reshape(1, D).astype(jnp.float32)
    cs = centers.astype(jnp.float32) * inv_ls        # (Dk, D) scaled centers
    cs_t = cs.T                                      # (D, Dk) natural MXU layout
    c_sq = jnp.sum(cs * cs, axis=-1).reshape(1, Dk)  # (1, Dk)
    w_t = w_out.astype(jnp.float32).T                # (Dk, D)
    b2 = b_out.reshape(1, D).astype(jnp.float32)

    if tile_n is None:
        tile_n = _pick_tile_n(N)
    tile_n = max(_SUBLANES, _round_up(int(tile_n), _SUBLANES))

    n_pad = _round_up(N, tile_n)
    if n_pad != N:
        x_flat = jnp.pad(x_flat, ((0, n_pad - N), (0, 0)))

    tile_rows = (tile_n * D) // _LANES
    lane_dense = (
        D % _LANES != 0
        and (tile_n * D) % _LANES == 0
        and (tile_rows % _SUBLANES == 0 or n_pad == tile_n)
    )

    args = (x_flat, cs_t, c_sq, inv_ls, w_t, b2)
    out_flat = None
    if lane_dense:
        try:
            out = _launch(*args, tile_n=tile_n, lane_dense=True)
            out_flat = jax.block_until_ready(out).reshape(n_pad, D)
        except Exception:
            # Lane-dense repack unsupported for this shape/toolchain; fall back.
            out_flat = None
    if out_flat is None:
        out_flat = _launch(*args, tile_n=tile_n, lane_dense=False)

    return out_flat[:N].reshape(B, L, D)


def reference(x, centers, lengthscale, w_out, b_out):
    B, L, D = x.shape
    xf = x.reshape(B * L, D) / lengthscale
    cf = centers / lengthscale
    sq = jnp.maximum(
        jnp.sum(xf ** 2, -1, keepdims=True)
        - 2.0 * xf @ cf.T
        + jnp.sum(cf ** 2, -1)[None, :], 0.0)
    k = jnp.exp(-0.5 * sq)
    return (k @ w_out.T + b_out).reshape(B, L, D)


if __name__ == "__main__":
    # Small config consistent with the module: emb_dim == num_kernels == D.
    B, L, D = 2, 64, 32
    Dk = D  # num_kernels = 1 * emb_dim

    key = jax.random.PRNGKey(0)
    kx, kc, kw, kb = jax.random.split(key, 4)

    x = jax.random.normal(kx, (B, L, D), dtype=jnp.float32)

    # Deterministic parameter init mirroring the module's __init__:
    centers = 0.1 * jax.random.normal(kc, (Dk, D), dtype=jnp.float32)
    # gpytorch RBFKernel default: raw_lengthscale = 0 -> softplus(0) = log(2),
    # one lengthscale per input dim (ARD).
    lengthscale = jnp.full((D,), math.log(2.0), dtype=jnp.float32)
    # nn.Linear(num_kernels, emb_dim) init: U(-1/sqrt(in), 1/sqrt(in))
    bound = 1.0 / math.sqrt(Dk)
    w_out = jax.random.uniform(kw, (D, Dk), minval=-bound, maxval=bound,
                               dtype=jnp.float32)
    b_out = jax.random.uniform(kb, (D,), minval=-bound, maxval=bound,
                               dtype=jnp.float32)

    out = jax.block_until_ready(
        rbf_kernel_ffn(x, centers, lengthscale, w_out, b_out))
    ref = reference(x, centers, lengthscale, w_out, b_out)
    assert out.shape == (B, L, D)
    assert jnp.allclose(out, ref, atol=1e-4, rtol=1e-4), "mismatch vs reference"

    # Ragged case (B*L not a multiple of the tile) exercises cdiv + padding.
    x2 = jax.random.normal(kx, (2, 9, D), dtype=jnp.float32)
    out2 = jax.block_until_ready(
        rbf_kernel_ffn(x2, centers, lengthscale, w_out, b_out))
    ref2 = reference(x2, centers, lengthscale, w_out, b_out)
    assert jnp.allclose(out2, ref2, atol=1e-4, rtol=1e-4), "mismatch (ragged)"

    print("KERNEL_OK")
</pallas_src>

<mosaic_0001>
module attributes {stable_mosaic.version = 11 : i64} {
  func.func @_rbf_ffn_kernel(%arg0: i32, %arg1: memref<64x32xf32, #tpu.memory_space<vmem>>, %arg2: memref<32x32xf32, #tpu.memory_space<vmem>>, %arg3: memref<1x32xf32, #tpu.memory_space<vmem>>, %arg4: memref<1x32xf32, #tpu.memory_space<vmem>>, %arg5: memref<32x32xf32, #tpu.memory_space<vmem>>, %arg6: memref<1x32xf32, #tpu.memory_space<vmem>>, %arg7: memref<16x128xf32, #tpu.memory_space<vmem>>) attributes {dimension_semantics = [#tpu.dimension_semantics<parallel>], iteration_bounds = array<i64: 2>, scalar_prefetch = 0 : i64, scratch_operands = 0 : i64, tpu.core_type = #tpu.core_type<tc>, window_params = [{transform_indices = @transform_0, window_bounds = array<i64: 64, 32>}, {pipeline_mode = #tpu.pipeline_mode<synchronous>, transform_indices = @transform_1, window_bounds = array<i64: 32, 32>}, {pipeline_mode = #tpu.pipeline_mode<synchronous>, transform_indices = @transform_2, window_bounds = array<i64: 1, 32>}, {pipeline_mode = #tpu.pipeline_mode<synchronous>, transform_indices = @transform_3, window_bounds = array<i64: 1, 32>}, {pipeline_mode = #tpu.pipeline_mode<synchronous>, transform_indices = @transform_4, window_bounds = array<i64: 32, 32>}, {pipeline_mode = #tpu.pipeline_mode<synchronous>, transform_indices = @transform_5, window_bounds = array<i64: 1, 32>}, {transform_indices = @transform_6, window_bounds = array<i64: 16, 128>}]} {
    %c0 = arith.constant 0 : index
    %c0_0 = arith.constant 0 : index
    %0 = vector.load %arg1[%c0, %c0_0] : memref<64x32xf32, #tpu.memory_space<vmem>>, vector<64x32xf32>
    %c0_1 = arith.constant 0 : index
    %c0_2 = arith.constant 0 : index
    %1 = vector.load %arg4[%c0_1, %c0_2] : memref<1x32xf32, #tpu.memory_space<vmem>>, vector<1x32xf32>
    %2 = vector.broadcast %1 : vector<1x32xf32> to vector<64x32xf32>
    %3 = arith.mulf %0, %2 : vector<64x32xf32>
    %4 = arith.mulf %3, %3 : vector<64x32xf32>
    %cst = arith.constant dense<0.000000e+00> : vector<64xf32>
    %5 = vector.multi_reduction <add>, %4, %cst [1] : vector<64x32xf32> to vector<64xf32>
    %6 = vector.shape_cast %5 : vector<64xf32> to vector<64x1xf32>
    %c0_3 = arith.constant 0 : index
    %c0_4 = arith.constant 0 : index
    %7 = vector.load %arg2[%c0_3, %c0_4] : memref<32x32xf32, #tpu.memory_space<vmem>>, vector<32x32xf32>
    %cst_5 = arith.constant dense<0.000000e+00> : vector<64x32xf32>
    %8 = tpu.matmul %3, %7, %cst_5 {dimension_numbers = #tpu.dot_dimension_numbers<[1], [0], [0], [1], [0, 0, 1, 1], [], []>} : vector<64x32xf32>, vector<32x32xf32>, vector<64x32xf32> -> vector<64x32xf32>
    %cst_6 = arith.constant 2.000000e+00 : f32
    %9 = vector.broadcast %cst_6 : f32 to vector<64x32xf32>
    %10 = arith.mulf %9, %8 : vector<64x32xf32>
    %11 = vector.broadcast %6 : vector<64x1xf32> to vector<64x32xf32>
    %12 = arith.subf %11, %10 : vector<64x32xf32>
    %c0_7 = arith.constant 0 : index
    %c0_8 = arith.constant 0 : index
    %13 = vector.load %arg3[%c0_7, %c0_8] : memref<1x32xf32, #tpu.memory_space<vmem>>, vector<1x32xf32>
    %14 = vector.broadcast %13 : vector<1x32xf32> to vector<64x32xf32>
    %15 = arith.addf %12, %14 : vector<64x32xf32>
    %cst_9 = arith.constant 0.000000e+00 : f32
    %16 = vector.broadcast %cst_9 : f32 to vector<64x32xf32>
    %17 = arith.maximumf %15, %16 : vector<64x32xf32>
    %cst_10 = arith.constant -5.000000e-01 : f32
    %18 = vector.broadcast %cst_10 : f32 to vector<64x32xf32>
    %19 = arith.mulf %18, %17 : vector<64x32xf32>
    %20 = math.exp %19 : vector<64x32xf32>
    %c0_11 = arith.constant 0 : index
    %c0_12 = arith.constant 0 : index
    %21 = vector.load %arg5[%c0_11, %c0_12] : memref<32x32xf32, #tpu.memory_space<vmem>>, vector<32x32xf32>
    %cst_13 = arith.constant dense<0.000000e+00> : vector<64x32xf32>
    %22 = tpu.matmul %20, %21, %cst_13 {dimension_numbers = #tpu.dot_dimension_numbers<[1], [0], [0], [1], [0, 0, 1, 1], [], []>} : vector<64x32xf32>, vector<32x32xf32>, vector<64x32xf32> -> vector<64x32xf32>
    %c0_14 = arith.constant 0 : index
    %c0_15 = arith.constant 0 : index
    %23 = vector.load %arg6[%c0_14, %c0_15] : memref<1x32xf32, #tpu.memory_space<vmem>>, vector<1x32xf32>
    %24 = vector.broadcast %23 : vector<1x32xf32> to vector<64x32xf32>
    %25 = arith.addf %22, %24 : vector<64x32xf32>
    %26 = vector.shape_cast %25 : vector<64x32xf32> to vector<16x128xf32>
    %c0_16 = arith.constant 0 : index
    %c0_17 = arith.constant 0 : index
    %27 = vector.load %arg7[%c0_16, %c0_17] : memref<16x128xf32, #tpu.memory_space<vmem>>, vector<16x128xf32>
    tpu.vector_store %arg7[%c0_16, %c0_17], %26 {strides = array<i32>} : memref<16x128xf32, #tpu.memory_space<vmem>>, vector<16x128xf32>,
    return
  }
  func.func @transform_0(%arg0: i32) -> (i32, i32) {
    %c0_i32 = arith.constant 0 : i32
    %c0_i32_0 = arith.constant 0 : i32
    return %arg0, %c0_i32 : i32, i32
  }
  func.func @transform_1(%arg0: i32) -> (i32, i32) {
    %c0_i32 = arith.constant 0 : i32
    %c0_i32_0 = arith.constant 0 : i32
    %c0_i32_1 = arith.constant 0 : i32
    return %c0_i32, %c0_i32_0 : i32, i32
  }
  func.func @transform_2(%arg0: i32) -> (i32, i32) {
    %c0_i32 = arith.constant 0 : i32
    %c0_i32_0 = arith.constant 0 : i32
    %c0_i32_1 = arith.constant 0 : i32
    return %c0_i32, %c0_i32_0 : i32, i32
  }
  func.func @transform_3(%arg0: i32) -> (i32, i32) {
    %c0_i32 = arith.constant 0 : i32
    %c0_i32_0 = arith.constant 0 : i32
    %c0_i32_1 = arith.constant 0 : i32
    return %c0_i32, %c0_i32_0 : i32, i32
  }
  func.func @transform_4(%arg0: i32) -> (i32, i32) {
    %c0_i32 = arith.constant 0 : i32
    %c0_i32_0 = arith.constant 0 : i32
    %c0_i32_1 = arith.constant 0 : i32
    return %c0_i32, %c0_i32_0 : i32, i32
  }
  func.func @transform_5(%arg0: i32) -> (i32, i32) {
    %c0_i32 = arith.constant 0 : i32
    %c0_i32_0 = arith.constant 0 : i32
    %c0_i32_1 = arith.constant 0 : i32
    return %c0_i32, %c0_i32_0 : i32, i32
  }
  func.func @transform_6(%arg0: i32) -> (i32, i32) {
    %c0_i32 = arith.constant 0 : i32
    %c0_i32_0 = arith.constant 0 : i32
    return %arg0, %c0_i32 : i32, i32
  }
}

module attributes {stable_mosaic.version = 11 : i64} {
  func.func @_rbf_ffn_kernel(%arg0: i32, %arg1: memref<64x32xf32, #tpu.memory_space<vmem>>, %arg2: memref<32x32xf32, #tpu.memory_space<vmem>>, %arg3: memref<1x32xf32, #tpu.memory_space<vmem>>, %arg4: memref<1x32xf32, #tpu.memory_space<vmem>>, %arg5: memref<32x32xf32, #tpu.memory_space<vmem>>, %arg6: memref<1x32xf32, #tpu.memory_space<vmem>>, %arg7: memref<64x32xf32, #tpu.memory_space<vmem>>) attributes {dimension_semantics = [#tpu.dimension_semantics<parallel>], iteration_bounds = array<i64: 2>, scalar_prefetch = 0 : i64, scratch_operands = 0 : i64, tpu.core_type = #tpu.core_type<tc>, window_params = [{transform_indices = @transform_0, window_bounds = array<i64: 64, 32>}, {pipeline_mode = #tpu.pipeline_mode<synchronous>, transform_indices = @transform_1, window_bounds = array<i64: 32, 32>}, {pipeline_mode = #tpu.pipeline_mode<synchronous>, transform_indices = @transform_2, window_bounds = array<i64: 1, 32>}, {pipeline_mode = #tpu.pipeline_mode<synchronous>, transform_indices = @transform_3, window_bounds = array<i64: 1, 32>}, {pipeline_mode = #tpu.pipeline_mode<synchronous>, transform_indices = @transform_4, window_bounds = array<i64: 32, 32>}, {pipeline_mode = #tpu.pipeline_mode<synchronous>, transform_indices = @transform_5, window_bounds = array<i64: 1, 32>}, {transform_indices = @transform_6, window_bounds = array<i64: 64, 32>}]} {
    %c0 = arith.constant 0 : index
    %c0_0 = arith.constant 0 : index
    %0 = vector.load %arg1[%c0, %c0_0] : memref<64x32xf32, #tpu.memory_space<vmem>>, vector<64x32xf32>
    %c0_1 = arith.constant 0 : index
    %c0_2 = arith.constant 0 : index
    %1 = vector.load %arg4[%c0_1, %c0_2] : memref<1x32xf32, #tpu.memory_space<vmem>>, vector<1x32xf32>
    %2 = vector.broadcast %1 : vector<1x32xf32> to vector<64x32xf32>
    %3 = arith.mulf %0, %2 : vector<64x32xf32>
    %4 = arith.mulf %3, %3 : vector<64x32xf32>
    %cst = arith.constant dense<0.000000e+00> : vector<64xf32>
    %5 = vector.multi_reduction <add>, %4, %cst [1] : vector<64x32xf32> to vector<64xf32>
    %6 = vector.shape_cast %5 : vector<64xf32> to vector<64x1xf32>
    %c0_3 = arith.constant 0 : index
    %c0_4 = arith.constant 0 : index
    %7 = vector.load %arg2[%c0_3, %c0_4] : memref<32x32xf32, #tpu.memory_space<vmem>>, vector<32x32xf32>
    %cst_5 = arith.constant dense<0.000000e+00> : vector<64x32xf32>
    %8 = tpu.matmul %3, %7, %cst_5 {dimension_numbers = #tpu.dot_dimension_numbers<[1], [0], [0], [1], [0, 0, 1, 1], [], []>} : vector<64x32xf32>, vector<32x32xf32>, vector<64x32xf32> -> vector<64x32xf32>
    %cst_6 = arith.constant 2.000000e+00 : f32
    %9 = vector.broadcast %cst_6 : f32 to vector<64x32xf32>
    %10 = arith.mulf %9, %8 : vector<64x32xf32>
    %11 = vector.broadcast %6 : vector<64x1xf32> to vector<64x32xf32>
    %12 = arith.subf %11, %10 : vector<64x32xf32>
    %c0_7 = arith.constant 0 : index
    %c0_8 = arith.constant 0 : index
    %13 = vector.load %arg3[%c0_7, %c0_8] : memref<1x32xf32, #tpu.memory_space<vmem>>, vector<1x32xf32>
    %14 = vector.broadcast %13 : vector<1x32xf32> to vector<64x32xf32>
    %15 = arith.addf %12, %14 : vector<64x32xf32>
    %cst_9 = arith.constant 0.000000e+00 : f32
    %16 = vector.broadcast %cst_9 : f32 to vector<64x32xf32>
    %17 = arith.maximumf %15, %16 : vector<64x32xf32>
    %cst_10 = arith.constant -5.000000e-01 : f32
    %18 = vector.broadcast %cst_10 : f32 to vector<64x32xf32>
    %19 = arith.mulf %18, %17 : vector<64x32xf32>
    %20 = math.exp %19 : vector<64x32xf32>
    %c0_11 = arith.constant 0 : index
    %c0_12 = arith.constant 0 : index
    %21 = vector.load %arg5[%c0_11, %c0_12] : memref<32x32xf32, #tpu.memory_space<vmem>>, vector<32x32xf32>
    %cst_13 = arith.constant dense<0.000000e+00> : vector<64x32xf32>
    %22 = tpu.matmul %20, %21, %cst_13 {dimension_numbers = #tpu.dot_dimension_numbers<[1], [0], [0], [1], [0, 0, 1, 1], [], []>} : vector<64x32xf32>, vector<32x32xf32>, vector<64x32xf32> -> vector<64x32xf32>
    %c0_14 = arith.constant 0 : index
    %c0_15 = arith.constant 0 : index
    %23 = vector.load %arg6[%c0_14, %c0_15] : memref<1x32xf32, #tpu.memory_space<vmem>>, vector<1x32xf32>
    %24 = vector.broadcast %23 : vector<1x32xf32> to vector<64x32xf32>
    %25 = arith.addf %22, %24 : vector<64x32xf32>
    %c0_16 = arith.constant 0 : index
    %c0_17 = arith.constant 0 : index
    %26 = vector.load %arg7[%c0_16, %c0_17] : memref<64x32xf32, #tpu.memory_space<vmem>>, vector<64x32xf32>
    tpu.vector_store %arg7[%c0_16, %c0_17], %25 {strides = array<i32>} : memref<64x32xf32, #tpu.memory_space<vmem>>, vector<64x32xf32>,
    return
  }
  func.func @transform_0(%arg0: i32) -> (i32, i32) {
    %c0_i32 = arith.constant 0 : i32
    %c0_i32_0 = arith.constant 0 : i32
    return %arg0, %c0_i32 : i32, i32
  }
  func.func @transform_1(%arg0: i32) -> (i32, i32) {
    %c0_i32 = arith.constant 0 : i32
    %c0_i32_0 = arith.constant 0 : i32
    %c0_i32_1 = arith.constant 0 : i32
    return %c0_i32, %c0_i32_0 : i32, i32
  }
  func.func @transform_2(%arg0: i32) -> (i32, i32) {
    %c0_i32 = arith.constant 0 : i32
    %c0_i32_0 = arith.constant 0 : i32
    %c0_i32_1 = arith.constant 0 : i32
    return %c0_i32, %c0_i32_0 : i32, i32
  }
  func.func @transform_3(%arg0: i32) -> (i32, i32) {
    %c0_i32 = arith.constant 0 : i32
    %c0_i32_0 = arith.constant 0 : i32
    %c0_i32_1 = arith.constant 0 : i32
    return %c0_i32, %c0_i32_0 : i32, i32
  }
  func.func @transform_4(%arg0: i32) -> (i32, i32) {
    %c0_i32 = arith.constant 0 : i32
    %c0_i32_0 = arith.constant 0 : i32
    %c0_i32_1 = arith.constant 0 : i32
    return %c0_i32, %c0_i32_0 : i32, i32
  }
  func.func @transform_5(%arg0: i32) -> (i32, i32) {
    %c0_i32 = arith.constant 0 : i32
    %c0_i32_0 = arith.constant 0 : i32
    %c0_i32_1 = arith.constant 0 : i32
    return %c0_i32, %c0_i32_0 : i32, i32
  }
  func.func @transform_6(%arg0: i32) -> (i32, i32) {
    %c0_i32 = arith.constant 0 : i32
    %c0_i32_0 = arith.constant 0 : i32
    return %arg0, %c0_i32 : i32, i32
  }
}

</mosaic_0001>

<llo_original>
// kernel: _launch.1
$region0: #{_launch.1}
  #allocation0 [shape = 'u32[]', space=smem, size = 0x4, offset = 0x4, fixed_abs, tag = 'smem constant byte address 0x4 - core index']
  #allocation1 [shape = 'u32[144,128]{1,0:T(1,128)}', space=vmem, size = 0x12000, scoped, tag = 'internal scratch']
  %s0 = inlined_call_operand.vmem [shape: f32[128,32], index: 0, kind: input, shape index: {}]
  %s1 = inlined_call_operand.vmem [shape: f32[32,32], index: 1, kind: input, shape index: {}]
  %s2 = inlined_call_operand.vmem [shape: f32[1,32], index: 2, kind: input, shape index: {}]
  %s3 = inlined_call_operand.vmem [shape: f32[1,32], index: 3, kind: input, shape index: {}]
  %s4 = inlined_call_operand.vmem [shape: f32[32,32], index: 4, kind: input, shape index: {}]
  %s5 = inlined_call_operand.vmem [shape: f32[1,32], index: 5, kind: input, shape index: {}]
  %s6 = inlined_call_operand.vmem [shape: f32[128,32], index: 6, kind: output, shape index: {}]
  %s7 = sld [smem:[#allocation0]]
  $region57: #{_launch.1} parent=0
    _
  %s9 = ssub.s32 1, %s7
  %s10 = scalar_select 0, %s9, %s7
  loop: start=0, step=1, limit=4
  $region2: #{_launch.1} parent=0 // loop_pre_header
    _
  $region3: #{_launch.1} parent=0 // loop_header
    %s12 = sphi 0, %s16
    %p13 = scmp.ge.s32.totalorder %s12, 4
    %s22 = sphi 0, %s24
    %s25 = sphi 0, %s22
    %s26 = sphi 0, %s25
    %s42 = sphi 0, %s26
    %s46 = sphi 0, %s46
    %s48 = sphi 0, %s46
    %s49 = sphi 0, %s48
    %s63 = sphi 0, %s49
    %s67 = sphi 0, %s67
    %s69 = sphi 0, %s67
    %s70 = sphi 0, %s69
    %s84 = sphi 0, %s70
    %s88 = sphi 0, %s88
    %s90 = sphi 0, %s88
    %s91 = sphi 0, %s90
    %s105 = sphi 0, %s91
    %s109 = sphi 0, %s109
    %s111 = sphi 0, %s109
    %s112 = sphi 0, %s111
    %s126 = sphi 0, %s112
    %s130 = sphi 0, %s130
    %s132 = sphi 0, %s130
    %s133 = sphi 0, %s132
    %s147 = sphi 0, %s133
    %s153 = sphi 0, %s155
    %s156 = sphi 0, %s153
    %s157 = sphi 0, %s156
    %s173 = sphi 0, %s157
  $region4: #{_launch.1} parent=0 // loop_header_branch
    %15 = sbr.rel (%p13) target = $region8
  $region5: #{_launch.1} parent=0 // loop_body
    %s17 = ssub.s32 %s12, 1
    %s18 = ssub.s32 %s12, 2
    %s19 = sadd.s32 %s12, 1
    %s20 = ssub.s32 %s12, %s19
    %p21 = scmp.eq.s32.totalorder %s20, 0
    %s23 = sadd.s32 %s22, 1
    %s24 = scalar_select %p21, %s22, %s23
    %p27 = pneg %p21
    %p28 = scmp.eq.s32.totalorder %s12, 1
    %p29 = por %p27, %p28
    %p30 = scmp.ne.s32.totalorder %s22, %s25
    %p31 = scmp.eq.s32.totalorder %s12, 0
    %p32 = por %p30, %p31
    %p33 = scmp.ne.s32.totalorder %s22, %s25
    %p34 = scmp.eq.s32.totalorder %s17, 1
    %p35 = por %p33, %p34
    %p36 = scmp.ne.s32.totalorder %s25, %s26
    %p37 = scmp.eq.s32.totalorder %s17, 0
    %p38 = por %p36, %p37
    %p39 = scmp.ne.s32.totalorder %s25, %s26
    %p40 = scmp.eq.s32.totalorder %s18, 1
    %p41 = por %p39, %p40
    %p43 = scmp.ne.s32.totalorder %s26, %s42
    %p44 = scmp.eq.s32.totalorder %s18, 0
    %p45 = por %p43, %p44
    %s47 = sadd.s32 %s46, 1
    %p50 = scmp.eq.s32.totalorder %s12, 1
    %p51 = scmp.ne.s32.totalorder %s46, %s48
    %p52 = scmp.eq.s32.totalorder %s12, 0
    %p53 = por %p51, %p52
    %p54 = scmp.ne.s32.totalorder %s46, %s48
    %p55 = scmp.eq.s32.totalorder %s17, 1
    %p56 = por %p54, %p55
    %p57 = scmp.ne.s32.totalorder %s48, %s49
    %p58 = scmp.eq.s32.totalorder %s17, 0
    %p59 = por %p57, %p58
    %p60 = scmp.ne.s32.totalorder %s48, %s49
    %p61 = scmp.eq.s32.totalorder %s18, 1
    %p62 = por %p60, %p61
    %p64 = scmp.ne.s32.totalorder %s49, %s63
    %p65 = scmp.eq.s32.totalorder %s18, 0
    %p66 = por %p64, %p65
    %s68 = sadd.s32 %s67, 1
    %p71 = scmp.eq.s32.totalorder %s12, 1
    %p72 = scmp.ne.s32.totalorder %s67, %s69
    %p73 = scmp.eq.s32.totalorder %s12, 0
    %p74 = por %p72, %p73
    %p75 = scmp.ne.s32.totalorder %s67, %s69
    %p76 = scmp.eq.s32.totalorder %s17, 1
    %p77 = por %p75, %p76
    %p78 = scmp.ne.s32.totalorder %s69, %s70
    %p79 = scmp.eq.s32.totalorder %s17, 0
    %p80 = por %p78, %p79
    %p81 = scmp.ne.s32.totalorder %s69, %s70
    %p82 = scmp.eq.s32.totalorder %s18, 1
    %p83 = por %p81, %p82
    %p85 = scmp.ne.s32.totalorder %s70, %s84
    %p86 = scmp.eq.s32.totalorder %s18, 0
    %p87 = por %p85, %p86
    %s89 = sadd.s32 %s88, 1
    %p92 = scmp.eq.s32.totalorder %s12, 1
    %p93 = scmp.ne.s32.totalorder %s88, %s90
    %p94 = scmp.eq.s32.totalorder %s12, 0
    %p95 = por %p93, %p94
    %p96 = scmp.ne.s32.totalorder %s88, %s90
    %p97 = scmp.eq.s32.totalorder %s17, 1
    %p98 = por %p96, %p97
    %p99 = scmp.ne.s32.totalorder %s90, %s91
    %p100 = scmp.eq.s32.totalorder %s17, 0
    %p101 = por %p99, %p100
    %p102 = scmp.ne.s32.totalorder %s90, %s91
    %p103 = scmp.eq.s32.totalorder %s18, 1
    %p104 = por %p102, %p103
    %p106 = scmp.ne.s32.totalorder %s91, %s105
    %p107 = scmp.eq.s32.totalorder %s18, 0
    %p108 = por %p106, %p107
    %s110 = sadd.s32 %s109, 1
    %p113 = scmp.eq.s32.totalorder %s12, 1
    %p114 = scmp.ne.s32.totalorder %s109, %s111
    %p115 = scmp.eq.s32.totalorder %s12, 0
    %p116 = por %p114, %p115
    %p117 = scmp.ne.s32.totalorder %s109, %s111
    %p118 = scmp.eq.s32.totalorder %s17, 1
    %p119 = por %p117, %p118
    %p120 = scmp.ne.s32.totalorder %s111, %s112
    %p121 = scmp.eq.s32.totalorder %s17, 0
    %p122 = por %p120, %p121
    %p123 = scmp.ne.s32.totalorder %s111, %s112
    %p124 = scmp.eq.s32.totalorder %s18, 1
    %p125 = por %p123, %p124
    %p127 = scmp.ne.s32.totalorder %s112, %s126
    %p128 = scmp.eq.s32.totalorder %s18, 0
    %p129 = por %p127, %p128
    %s131 = sadd.s32 %s130, 1
    %p134 = scmp.eq.s32.totalorder %s12, 1
    %p135 = scmp.ne.s32.totalorder %s130, %s132
    %p136 = scmp.eq.s32.totalorder %s12, 0
    %p137 = por %p135, %p136
    %p138 = scmp.ne.s32.totalorder %s130, %s132
    %p139 = scmp.eq.s32.totalorder %s17, 1
    %p140 = por %p138, %p139
    %p141 = scmp.ne.s32.totalorder %s132, %s133
    %p142 = scmp.eq.s32.totalorder %s17, 0
    %p143 = por %p141, %p142
    %p144 = scmp.ne.s32.totalorder %s132, %s133
    %p145 = scmp.eq.s32.totalorder %s18, 1
    %p146 = por %p144, %p145
    %p148 = scmp.ne.s32.totalorder %s133, %s147
    %p149 = scmp.eq.s32.totalorder %s18, 0
    %p150 = por %p148, %p149
    %s151 = ssub.s32 %s12, %s19
    %p152 = scmp.eq.s32.totalorder %s151, 0
    %s154 = sadd.s32 %s153, 1
    %s155 = scalar_select %p152, %s153, %s154
    %p158 = pneg %p152
    %p159 = scmp.eq.s32.totalorder %s12, 1
    %p160 = por %p158, %p159
    %p161 = scmp.ne.s32.totalorder %s153, %s156
    %p162 = scmp.eq.s32.totalorder %s12, 0
    %p163 = por %p161, %p162
    %p164 = scmp.ne.s32.totalorder %s153, %s156
    %p165 = scmp.eq.s32.totalorder %s17, 1
    %p166 = por %p164, %p165
    %p167 = scmp.ne.s32.totalorder %s156, %s157
    %p168 = scmp.eq.s32.totalorder %s17, 0
    %p169 = por %p167, %p168
    %p170 = scmp.ne.s32.totalorder %s156, %s157
    %p171 = scmp.eq.s32.totalorder %s18, 1
    %p172 = por %p170, %p171
    %p174 = scmp.ne.s32.totalorder %s157, %s173
    %p175 = scmp.eq.s32.totalorder %s18, 0
    %p176 = por %p174, %p175
    %p177 = scmp.le.s32.totalorder 1, %s12
    %p178 = scmp.lt.s32.totalorder %s12, 3
    %p179 = pnand %p177, %p178
    %p180 = pneg %p179
    // Predicated region
    $region9: #{_launch.1} parent=5 // pred_check
      _
    $region10: #{_launch.1} parent=5 // pred_check_branch
      %182 = sbr.rel (%p179) target = $region12
    $region11: #{_launch.1} parent=5 // pred_region
      %s183 = ssub.s32 %s12, 1
      // Predicated region
      $region13: #{_launch.1} parent=11 // pred_check
        %p184 = pneg %p59
      $region14: #{_launch.1} parent=11 // pred_check_branch
        %186 = sbr.rel (%p184) target = $region16
      $region15: #{_launch.1} parent=11 // pred_region
        _
      $region16: #{_launch.1} parent=11 // pred_fallthru
        _
      // Predicated region
      $region17: #{_launch.1} parent=11 // pred_check
        %p187 = pneg %p80
      $region18: #{_launch.1} parent=11 // pred_check_branch
        %189 = sbr.rel (%p187) target = $region20
      $region19: #{_launch.1} parent=11 // pred_region
        _
      $region20: #{_launch.1} parent=11 // pred_fallthru
        _
      // Predicated region
      $region21: #{_launch.1} parent=11 // pred_check
        %p190 = pneg %p101
      $region22: #{_launch.1} parent=11 // pred_check_branch
        %192 = sbr.rel (%p190) target = $region24
      $region23: #{_launch.1} parent=11 // pred_region
        _
      $region24: #{_launch.1} parent=11 // pred_fallthru
        _
      // Predicated region
      $region25: #{_launch.1} parent=11 // pred_check
        %p193 = pneg %p122
      $region26: #{_launch.1} parent=11 // pred_check_branch
        %195 = sbr.rel (%p193) target = $region28
      $region27: #{_launch.1} parent=11 // pred_region
        _
      $region28: #{_launch.1} parent=11 // pred_fallthru
        _
      // Predicated region
      $region29: #{_launch.1} parent=11 // pred_check
        %p196 = pneg %p143
      $region30: #{_launch.1} parent=11 // pred_check_branch
        %198 = sbr.rel (%p196) target = $region32
      $region31: #{_launch.1} parent=11 // pred_region
        _
      $region32: #{_launch.1} parent=11 // pred_fallthru
        _
    $region12: #{_launch.1} parent=5 // pred_fallthru
      _
    %p199 = scmp.lt.s32.totalorder %s12, 2
    // Predicated region
    $region33: #{_launch.1} parent=5 // pred_check
      %p200 = pneg %p199
    $region34: #{_launch.1} parent=5 // pred_check_branch
      %202 = sbr.rel (%p200) target = $region36
    $region35: #{_launch.1} parent=5 // pred_region
      // Predicated region
      $region37: #{_launch.1} parent=35 // pred_check
        %p203 = pneg %p32
      $region38: #{_launch.1} parent=35 // pred_check_branch
        %205 = sbr.rel (%p203) target = $region40
      $region39: #{_launch.1} parent=35 // pred_region
        %s206 = smul.u32 8, %s12
        %p207 = scmp.lt.s32.totalorder %s206, 15
        %s208 = scalar_select %p207, %s206, 15
        %s209 = smul.addr %s208, 8
        %s210 = scalar_lea.vmem %s0, %s209
        %s211 = smul.u32 8, %s12
      $region40: #{_launch.1} parent=35 // pred_fallthru
        _
    $region36: #{_launch.1} parent=5 // pred_fallthru
      _
    %p212 = scmp.le.s32.totalorder 1, %s12
    %p213 = scmp.lt.s32.totalorder %s12, 3
    %p214 = pnand %p212, %p213
    %p215 = pneg %p214
    // Predicated region
    $region41: #{_launch.1} parent=5 // pred_check
      _
    $region42: #{_launch.1} parent=5 // pred_check_branch
      %217 = sbr.rel (%p214) target = $region44
    $region43: #{_launch.1} parent=5 // pred_region
      %s218 = ssub.s32 %s12, 1
      %s219 = smul.u32 8, %s17
      %p220 = scmp.lt.s32.totalorder %s219, 15
      %s221 = scalar_select %p220, %s219, 15
      %s222 = smul.addr %s221, 8
      %s223 = scalar_lea.vmem %s0, %s222
      %p224 = pneg %p38
      %p225 = pneg %p35
      %p226 = pneg %p59
      %p227 = pneg %p56
      %p228 = pneg %p80
      %p229 = pneg %p77
      %p230 = pneg %p101
      %p231 = pneg %p98
      %p232 = pneg %p122
      %p233 = pneg %p119
      %p234 = pneg %p143
      %p235 = pneg %p140
      %p236 = pneg %p169
      %p237 = pneg %p166
      %s238 = smul.u32 8, %s17
      %p239 = scmp.lt.s32.totalorder %s238, 15
      %s240 = scalar_select %p239, %s238, 15
      %s241 = smul.addr %s240, 8
      %s242 = scalar_lea.vmem %s6, %s241
      %s243 = smul.u32 8, %s17
      %p244 = scmp.lt.s32.totalorder %s243, 15
      %s245 = scalar_select %p244, %s243, 15
      %s246 = smul.addr %s245, 8
      %s247 = scalar_lea.vmem %s0, %s246
      %s248 = smul.u32 8, %s17
      %s249 = smul.u32 8, %s17
      %p250 = scmp.lt.s32.totalorder %s249, 15
      %s251 = scalar_select %p250, %s249, 15
      %s252 = smul.addr %s251, 8
      %s253 = scalar_lea.vmem %s6, %s252
      %s254 = smul.u32 8, %s17
      %v255 = vld [vmem:[%s247] sm:$0xff]
      %v256 = vld [vmem:[%s247 + $0x8] sm:$0xff]
      %v257 = vld [vmem:[%s247 + $0x10] sm:$0xff]
      %v258 = vld [vmem:[%s247 + $0x18] sm:$0xff]
      %v259 = vld [vmem:[%s247 + $0x20] sm:$0xff]
      %v260 = vld [vmem:[%s247 + $0x28] sm:$0xff]
      %v261 = vld [vmem:[%s247 + $0x30] sm:$0xff]
      %v262 = vld [vmem:[%s247 + $0x38] sm:$0xff]
      %v263 = vld [vmem:[%s3] sm:$0x1]
      %v265 = vlaneseq
      %v266 = vshrl.u32 %v265, 7
      %v267 = vsub.s32 0, %v266
      %v268 = vrot.slane %v263, %v267
      %v270 = vmul.f32 %v255, %v268
      %v271 = vmul.f32 %v256, %v268
      %v272 = vmul.f32 %v257, %v268
      %v273 = vmul.f32 %v258, %v268
      %v274 = vmul.f32 %v259, %v268
      %v275 = vmul.f32 %v260, %v268
      %v276 = vmul.f32 %v261, %v268
      %v277 = vmul.f32 %v262, %v268
      %v278 = vmul.f32 %v270, %v270
      %v279 = vmul.f32 %v271, %v271
      %v280 = vmul.f32 %v272, %v272
      %v281 = vmul.f32 %v273, %v273
      %v282 = vmul.f32 %v274, %v274
      %v283 = vmul.f32 %v275, %v275
      %v284 = vmul.f32 %v276, %v276
      %v285 = vmul.f32 %v277, %v277
      %vm286 = vcmask 261120
      %v287 = vsel %vm286, %v278, 0.0
      %288 = vadd.xlane.f32.xlu0 %v287
      %v289 = vpop.xlane.xlu0 %288
      %v290 = vsel %vm286, %v279, 0.0
      %291 = vadd.xlane.f32.xlu0 %v290
      %v292 = vpop.xlane.xlu0 %291
      %v293 = vsel %vm286, %v280, 0.0
      %294 = vadd.xlane.f32.xlu0 %v293
      %v295 = vpop.xlane.xlu0 %294
      %v296 = vsel %vm286, %v281, 0.0
      %297 = vadd.xlane.f32.xlu0 %v296
      %v298 = vpop.xlane.xlu0 %297
      %v299 = vsel %vm286, %v282, 0.0
      %300 = vadd.xlane.f32.xlu0 %v299
      %v301 = vpop.xlane.xlu0 %300
      %v302 = vsel %vm286, %v283, 0.0
      %303 = vadd.xlane.f32.xlu0 %v302
      %v304 = vpop.xlane.xlu0 %303
      %v305 = vsel %vm286, %v284, 0.0
      %306 = vadd.xlane.f32.xlu0 %v305
      %v307 = vpop.xlane.xlu0 %306
      %v308 = vsel %vm286, %v285, 0.0
      %309 = vadd.xlane.f32.xlu0 %v308
      %v310 = vpop.xlane.xlu0 %309
      %v311 = vld [vmem:[%s1] sm:$0xff]
      %v312 = vld [vmem:[%s1 + $0x8] sm:$0xff]
      %v313 = vld [vmem:[%s1 + $0x10] sm:$0xff]
      %v314 = vld [vmem:[%s1 + $0x18] sm:$0xff]
      %v316 = vsel %vm286, %v270, 0
      %v319 = vsel %vm286, %v271, 0
      %v322 = vsel %vm286, %v272, 0
      %v325 = vsel %vm286, %v273, 0
      %v328 = vsel %vm286, %v274, 0
      %v331 = vsel %vm286, %v275, 0
      %v334 = vsel %vm286, %v276, 0
      %v337 = vsel %vm286, %v277, 0
      %339 = vmatprep.subr.mxu0 0.0
      %340 = vmatpush1.msra.mxu0 %v311
      %341 = vmatprep.subr.mxu0 0.0
      %342 = vmatpush1.msra.mxu0 %v312
      %343 = vmatprep.subr.mxu0 0.0
      %344 = vmatpush1.msra.mxu0 %v313
      %345 = vmatprep.subr.mxu0 0.0
      %346 = vmatpush1.msra.mxu0 %v314
      %347 = vmatprep.subr.mxu0 0.0
      %348 = vmatpush1.msra.mxu0 0.0
      %349 = vmatprep.subr.mxu0 0.0
      %350 = vmatpush1.msra.mxu0 0.0
      %351 = vmatprep.subr.mxu0 0.0
      %352 = vmatpush1.msra.mxu0 0.0
      %353 = vmatprep.subr.mxu0 0.0
      %354 = vmatpush1.msra.mxu0 0.0
      %355 = vmatprep.subr.mxu0 0.0
      %356 = vmatpush1.msra.mxu0 0.0
      %357 = vmatprep.subr.mxu0 0.0
      %358 = vmatpush1.msra.mxu0 0.0
      %359 = vmatprep.subr.mxu0 0.0
      %360 = vmatpush1.msra.mxu0 0.0
      %361 = vmatprep.subr.mxu0 0.0
      %362 = vmatpush1.msra.mxu0 0.0
      %363 = vmatprep.subr.mxu0 0.0
      %364 = vmatpush1.msra.mxu0 0.0
      %365 = vmatprep.subr.mxu0 0.0
      %366 = vmatpush1.msra.mxu0 0.0
      %367 = vmatprep.subr.mxu0 0.0
      %368 = vmatpush1.msra.mxu0 0.0
      %369 = vmatprep.subr.mxu0 0.0
      %370 = vmatpush1.msra.mxu0 0.0
      %371 = vmatprep.subr.mxu0 0.0
      %372 = vmatpush1.msra.mxu0 0.0
      %373 = vmatprep.subr.mxu0 0.0
      %374 = vmatpush1.msra.mxu0 0.0
      %375 = vmatprep.subr.mxu0 0.0
      %376 = vmatpush1.msra.mxu0 0.0
      %377 = vmatprep.subr.mxu0 0.0
      %378 = vmatpush1.msra.mxu0 0.0
      %379 = vmatprep.subr.mxu0 0.0
      %380 = vmatpush1.msra.mxu0 0.0
      %381 = vmatprep.subr.mxu0 0.0
      %382 = vmatpush1.msra.mxu0 0.0
      %383 = vmatprep.subr.mxu0 0.0
      %384 = vmatpush1.msra.mxu0 0.0
      %385 = vmatprep.subr.mxu0 0.0
      %386 = vmatpush1.msra.mxu0 0.0
      %387 = vmatprep.subr.mxu0 0.0
      %388 = vmatpush1.msra.mxu0 0.0
      %389 = vmatprep.subr.mxu0 0.0
      %390 = vmatpush1.msra.mxu0 0.0
      %391 = vmatprep.subr.mxu0 0.0
      %392 = vmatpush1.msra.mxu0 0.0
      %393 = vmatprep.subr.mxu0 0.0
      %394 = vmatpush1.msra.mxu0 0.0
      %395 = vmatprep.subr.mxu0 0.0
      %396 = vmatpush1.msra.mxu0 0.0
      %397 = vmatprep.subr.mxu0 0.0
      %398 = vmatpush1.msra.mxu0 0.0
      %399 = vmatprep.subr.mxu0 0.0
      %400 = vmatpush1.msra.mxu0 0.0
      %401 = vmatprep.subr.mxu0 0.0
      %402 = vmatpush1.msra.mxu0 0.0
      %403 = vmatprep.mubr.f32.mxu0 0.0
      %404 = vmatmul.mubr.f32.gmra.mrb[0].mxu0 %v316
      %v405 = vpop.f32.mrb[0].mxu0
      %v406 = vadd.f32 0.0, %v405
      %v407 = vpop.f32.mrb[0].mxu0
      %408 = vmatprep.mubr.f32.mxu0 0.0
      %409 = vmatmul.mubr.f32.gmra.mrb[0].mxu0 %v319
      %v410 = vpop.f32.mrb[0].mxu0
      %v411 = vadd.f32 0.0, %v410
      %v412 = vpop.f32.mrb[0].mxu0
      %413 = vmatprep.mubr.f32.mxu0 0.0
      %414 = vmatmul.mubr.f32.gmra.mrb[0].mxu0 %v322
      %v415 = vpop.f32.mrb[0].mxu0
      %v416 = vadd.f32 0.0, %v415
      %v417 = vpop.f32.mrb[0].mxu0
      %418 = vmatprep.mubr.f32.mxu0 0.0
      %419 = vmatmul.mubr.f32.gmra.mrb[0].mxu0 %v325
      %v420 = vpop.f32.mrb[0].mxu0
      %v421 = vadd.f32 0.0, %v420
      %v422 = vpop.f32.mrb[0].mxu0
      %423 = vmatprep.mubr.f32.mxu0 0.0
      %424 = vmatmul.mubr.f32.gmra.mrb[0].mxu0 %v328
      %v425 = vpop.f32.mrb[0].mxu0
      %v426 = vadd.f32 0.0, %v425
      %v427 = vpop.f32.mrb[0].mxu0
      %428 = vmatprep.mubr.f32.mxu0 0.0
      %429 = vmatmul.mubr.f32.gmra.mrb[0].mxu0 %v331
      %v430 = vpop.f32.mrb[0].mxu0
      %v431 = vadd.f32 0.0, %v430
      %v432 = vpop.f32.mrb[0].mxu0
      %433 = vmatprep.mubr.f32.mxu0 0.0
      %434 = vmatmul.mubr.f32.gmra.mrb[0].mxu0 %v334
      %v435 = vpop.f32.mrb[0].mxu0
      %v436 = vadd.f32 0.0, %v435
      %v437 = vpop.f32.mrb[0].mxu0
      %438 = vmatprep.mubr.f32.mxu0 0.0
      %439 = vmatmul.mubr.f32.gmra.mrb[0].mxu0 %v337
      %v440 = vpop.f32.mrb[0].mxu0
      %v441 = vadd.f32 0.0, %v440
      %v442 = vpop.f32.mrb[0].mxu0
      %443 = vdwg.mxu0
      %v444 = vmul.f32 %v406, 2.0
      %v445 = vmul.f32 %v411, 2.0
      %v446 = vmul.f32 %v416, 2.0
      %v447 = vmul.f32 %v421, 2.0
      %v448 = vmul.f32 %v426, 2.0
      %v449 = vmul.f32 %v431, 2.0
      %v450 = vmul.f32 %v436, 2.0
      %v451 = vmul.f32 %v441, 2.0
      %v452 = vsub.f32 %v289, %v444
      %v453 = vsub.f32 %v292, %v445
      %v454 = vsub.f32 %v295, %v446
      %v455 = vsub.f32 %v298, %v447
      %v456 = vsub.f32 %v301, %v448
      %v457 = vsub.f32 %v304, %v449
      %v458 = vsub.f32 %v307, %v450
      %v459 = vsub.f32 %v310, %v451
      %v460 = vld [vmem:[%s2] sm:$0x1]
      %v462 = vlaneseq
      %v463 = vshrl.u32 %v462, 7
      %v464 = vsub.s32 0, %v463
      %v465 = vrot.slane %v460, %v464
      %v467 = vadd.f32 %v452, %v465
      %v468 = vadd.f32 %v453, %v465
      %v469 = vadd.f32 %v454, %v465
      %v470 = vadd.f32 %v455, %v465
      %v471 = vadd.f32 %v456, %v465
      %v472 = vadd.f32 %v457, %v465
      %v473 = vadd.f32 %v458, %v465
      %v474 = vadd.f32 %v459, %v465
      %v475 = vmax.f32 %v467, 0.0
      %v476 = vmax.f32 %v468, 0.0
      %v477 = vmax.f32 %v469, 0.0
      %v478 = vmax.f32 %v470, 0.0
      %v479 = vmax.f32 %v471, 0.0
      %v480 = vmax.f32 %v472, 0.0
      %v481 = vmax.f32 %v473, 0.0
      %v482 = vmax.f32 %v474, 0.0
      %v483 = vmul.f32 %v475, -0.5
      %v484 = vmul.f32 %v476, -0.5
      %v485 = vmul.f32 %v477, -0.5
      %v486 = vmul.f32 %v478, -0.5
      %v487 = vmul.f32 %v479, -0.5
      %v488 = vmul.f32 %v480, -0.5
      %v489 = vmul.f32 %v481, -0.5
      %v490 = vmul.f32 %v482, -0.5
      %v491 = vmul.f32 %v483, 1.442695
      %v492 = vpow.pop %v491
      %v493 = vmul.f32 %v484, 1.442695
      %v494 = vpow.pop %v493
      %v495 = vmul.f32 %v485, 1.442695
      %v496 = vpow.pop %v495
      %v497 = vmul.f32 %v486, 1.442695
      %v498 = vpow.pop %v497
      %v499 = vmul.f32 %v487, 1.442695
      %v500 = vpow.pop %v499
      %v501 = vmul.f32 %v488, 1.442695
      %v502 = vpow.pop %v501
      %v503 = vmul.f32 %v489, 1.442695
      %v504 = vpow.pop %v503
      %v505 = vmul.f32 %v490, 1.442695
      %v506 = vpow.pop %v505
      %v507 = vld [vmem:[%s4] sm:$0xff]
      %v508 = vld [vmem:[%s4 + $0x8] sm:$0xff]
      %v509 = vld [vmem:[%s4 + $0x10] sm:$0xff]
      %v510 = vld [vmem:[%s4 + $0x18] sm:$0xff]
      %v511 = vld [vmem:[%s5] sm:$0x1]
      %v513 = vlaneseq
      %v514 = vshrl.u32 %v513, 7
      %v515 = vsub.s32 0, %v514
      %v516 = vrot.slane %v511, %v515
      %v519 = vsel %vm286, %v492, 0
      %v522 = vsel %vm286, %v494, 0
      %v525 = vsel %vm286, %v496, 0
      %v528 = vsel %vm286, %v498, 0
      %v531 = vsel %vm286, %v500, 0
      %v534 = vsel %vm286, %v502, 0
      %v537 = vsel %vm286, %v504, 0
      %v540 = vsel %vm286, %v506, 0
      %542 = vmatprep.subr.mxu0 0.0
      %543 = vmatpush1.msra.mxu0 %v507
      %544 = vmatprep.subr.mxu0 0.0
      %545 = vmatpush1.msra.mxu0 %v508
      %546 = vmatprep.subr.mxu0 0.0
      %547 = vmatpush1.msra.mxu0 %v509
      %548 = vmatprep.subr.mxu0 0.0
      %549 = vmatpush1.msra.mxu0 %v510
      %550 = vmatprep.subr.mxu0 0.0
      %551 = vmatpush1.msra.mxu0 0.0
      %552 = vmatprep.subr.mxu0 0.0
      %553 = vmatpush1.msra.mxu0 0.0
      %554 = vmatprep.subr.mxu0 0.0
      %555 = vmatpush1.msra.mxu0 0.0
      %556 = vmatprep.subr.mxu0 0.0
      %557 = vmatpush1.msra.mxu0 0.0
      %558 = vmatprep.subr.mxu0 0.0
      %559 = vmatpush1.msra.mxu0 0.0
      %560 = vmatprep.subr.mxu0 0.0
      %561 = vmatpush1.msra.mxu0 0.0
      %562 = vmatprep.subr.mxu0 0.0
      %563 = vmatpush1.msra.mxu0 0.0
      %564 = vmatprep.subr.mxu0 0.0
      %565 = vmatpush1.msra.mxu0 0.0
      %566 = vmatprep.subr.mxu0 0.0
      %567 = vmatpush1.msra.mxu0 0.0
      %568 = vmatprep.subr.mxu0 0.0
      %569 = vmatpush1.msra.mxu0 0.0
      %570 = vmatprep.subr.mxu0 0.0
      %571 = vmatpush1.msra.mxu0 0.0
      %572 = vmatprep.subr.mxu0 0.0
      %573 = vmatpush1.msra.mxu0 0.0
      %574 = vmatprep.subr.mxu0 0.0
      %575 = vmatpush1.msra.mxu0 0.0
      %576 = vmatprep.subr.mxu0 0.0
      %577 = vmatpush1.msra.mxu0 0.0
      %578 = vmatprep.subr.mxu0 0.0
      %579 = vmatpush1.msra.mxu0 0.0
      %580 = vmatprep.subr.mxu0 0.0
      %581 = vmatpush1.msra.mxu0 0.0
      %582 = vmatprep.subr.mxu0 0.0
      %583 = vmatpush1.msra.mxu0 0.0
      %584 = vmatprep.subr.mxu0 0.0
      %585 = vmatpush1.msra.mxu0 0.0
      %586 = vmatprep.subr.mxu0 0.0
      %587 = vmatpush1.msra.mxu0 0.0
      %588 = vmatprep.subr.mxu0 0.0
      %589 = vmatpush1.msra.mxu0 0.0
      %590 = vmatprep.subr.mxu0 0.0
      %591 = vmatpush1.msra.mxu0 0.0
      %592 = vmatprep.subr.mxu0 0.0
      %593 = vmatpush1.msra.mxu0 0.0
      %594 = vmatprep.subr.mxu0 0.0
      %595 = vmatpush1.msra.mxu0 0.0
      %596 = vmatprep.subr.mxu0 0.0
      %597 = vmatpush1.msra.mxu0 0.0
      %598 = vmatprep.subr.mxu0 0.0
      %599 = vmatpush1.msra.mxu0 0.0
      %600 = vmatprep.subr.mxu0 0.0
      %601 = vmatpush1.msra.mxu0 0.0
      %602 = vmatprep.subr.mxu0 0.0
      %603 = vmatpush1.msra.mxu0 0.0
      %604 = vmatprep.subr.mxu0 0.0
      %605 = vmatpush1.msra.mxu0 0.0
      %606 = vmatprep.mubr.f32.mxu0 0.0
      %607 = vmatmul.mubr.f32.gmra.mrb[0].mxu0 %v519
      %v608 = vpop.f32.mrb[0].mxu0
      %v609 = vadd.f32 %v516, %v608
      %v610 = vpop.f32.mrb[0].mxu0
      %611 = vmatprep.mubr.f32.mxu0 0.0
      %612 = vmatmul.mubr.f32.gmra.mrb[0].mxu0 %v522
      %v613 = vpop.f32.mrb[0].mxu0
      %v614 = vadd.f32 %v516, %v613
      %v615 = vpop.f32.mrb[0].mxu0
      %616 = vmatprep.mubr.f32.mxu0 0.0
      %617 = vmatmul.mubr.f32.gmra.mrb[0].mxu0 %v525
      %v618 = vpop.f32.mrb[0].mxu0
      %v619 = vadd.f32 %v516, %v618
      %v620 = vpop.f32.mrb[0].mxu0
      %621 = vmatprep.mubr.f32.mxu0 0.0
      %622 = vmatmul.mubr.f32.gmra.mrb[0].mxu0 %v528
      %v623 = vpop.f32.mrb[0].mxu0
      %v624 = vadd.f32 %v516, %v623
      %v625 = vpop.f32.mrb[0].mxu0
      %626 = vmatprep.mubr.f32.mxu0 0.0
      %627 = vmatmul.mubr.f32.gmra.mrb[0].mxu0 %v531
      %v628 = vpop.f32.mrb[0].mxu0
      %v629 = vadd.f32 %v516, %v628
      %v630 = vpop.f32.mrb[0].mxu0
      %631 = vmatprep.mubr.f32.mxu0 0.0
      %632 = vmatmul.mubr.f32.gmra.mrb[0].mxu0 %v534
      %v633 = vpop.f32.mrb[0].mxu0
      %v634 = vadd.f32 %v516, %v633
      %v635 = vpop.f32.mrb[0].mxu0
      %636 = vmatprep.mubr.f32.mxu0 0.0
      %637 = vmatmul.mubr.f32.gmra.mrb[0].mxu0 %v537
      %v638 = vpop.f32.mrb[0].mxu0
      %v639 = vadd.f32 %v516, %v638
      %v640 = vpop.f32.mrb[0].mxu0
      %641 = vmatprep.mubr.f32.mxu0 0.0
      %642 = vmatmul.mubr.f32.gmra.mrb[0].mxu0 %v540
      %v643 = vpop.f32.mrb[0].mxu0
      %v644 = vadd.f32 %v516, %v643
      %v645 = vpop.f32.mrb[0].mxu0
      %646 = vdwg.mxu0
      %647 = vst.msk [vmem:[%s253] sm:$0xff] %vm286, %v609
      %648 = vst.msk [vmem:[%s253 + $0x8] sm:$0xff] %vm286, %v614
      %649 = vst.msk [vmem:[%s253 + $0x10] sm:$0xff] %vm286, %v619
      %650 = vst.msk [vmem:[%s253 + $0x18] sm:$0xff] %vm286, %v624
      %651 = vst.msk [vmem:[%s253 + $0x20] sm:$0xff] %vm286, %v629
      %652 = vst.msk [vmem:[%s253 + $0x28] sm:$0xff] %vm286, %v634
      %653 = vst.msk [vmem:[%s253 + $0x30] sm:$0xff] %vm286, %v639
      %654 = vst.msk [vmem:[%s253 + $0x38] sm:$0xff] %vm286, %v644
      %s655 = smul.u32 8, %s17
      %p656 = scmp.lt.s32.totalorder %s655, 15
      %s657 = scalar_select %p656, %s655, 15
      %s658 = smul.addr %s657, 8
      %s659 = scalar_lea.vmem %s6, %s658
      // Predicated region
      $region45: #{_launch.1} parent=43 // pred_check
        %p660 = pneg %p166
      $region46: #{_launch.1} parent=43 // pred_check_branch
        %662 = sbr.rel (%p660) target = $region48
      $region47: #{_launch.1} parent=43 // pred_region
        %s663 = smul.u32 8, %s17
      $region48: #{_launch.1} parent=43 // pred_fallthru
        _
    $region44: #{_launch.1} parent=5 // pred_fallthru
      _
    %p664 = scmp.le.s32.totalorder 2, %s12
    // Predicated region
    $region49: #{_launch.1} parent=5 // pred_check
      %p665 = pneg %p664
    $region50: #{_launch.1} parent=5 // pred_check_branch
      %667 = sbr.rel (%p665) target = $region52
    $region51: #{_launch.1} parent=5 // pred_region
      %s668 = ssub.s32 %s12, 2
      // Predicated region
      $region53: #{_launch.1} parent=51 // pred_check
        %p669 = pneg %p172
      $region54: #{_launch.1} parent=51 // pred_check_branch
        %671 = sbr.rel (%p669) target = $region56
      $region55: #{_launch.1} parent=51 // pred_region
        %s672 = smul.u32 8, %s18
        %p673 = scmp.lt.s32.totalorder %s672, 15
        %s674 = scalar_select %p673, %s672, 15
        %s675 = smul.addr %s674, 8
        %s676 = scalar_lea.vmem %s6, %s675
      $region56: #{_launch.1} parent=51 // pred_fallthru
        _
    $region52: #{_launch.1} parent=5 // pred_fallthru
      _
  $region6: #{_launch.1} parent=0 // loop_footer
    %s16 = sadd.s32 1, %s12
  $region7: #{_launch.1} parent=0 // loop_footer_branch
    %11 = sbr.rel target = $region3
  $region8: #{_launch.1} parent=0 // loop_exit
    _

</llo_original>
